<compile_context>
chip_gen: v7x
topology: tpu7x:2x2x1
jax: 0.10.0
libtpu: 0.0.40
codegen_flags: <defaults>
</compile_context>

<pallas_src>
import jax
import jax.numpy as jnp
from jax import lax
from jax.experimental import pallas as pl
from jax.experimental.pallas import tpu as pltpu


def _round_up(x, m):
    return (x + m - 1) // m * m


def _pick_tile(total, unit, cap):
    """Largest multiple of `unit` that divides `total` and is <= cap."""
    t = max(unit, (min(total, cap) // unit) * unit)
    while total % t != 0:
        t -= unit
    return t


def _ebc_kernel(idx_ref, w_ref, out_ref):
    # idx_ref: (B_pad, L)  int32   -- shared indices, resident across the grid
    # w_ref:   (TE, TD)    float32 -- weight slab of bag b, E-slice k, D-slice j
    # out_ref: (B_pad, TD) float32 -- output tile of bag b, D-slice j
    #                                 (resident across the E reduction axis)
    k = pl.program_id(2)

    @pl.when(k == 0)
    def _init():
        out_ref[...] = jnp.zeros_like(out_ref)

    idx = idx_ref[...]                                  # (B_pad, L) int32
    b_pad, bag_len = idx.shape
    te = w_ref.shape[0]

    # Histogram of the current E-slice: counts[b, e] = #{l : idx[b, l] == k*TE + e}.
    # Pure VALU compare+add on one tile; recomputed per step (cheap, hidden
    # under the weight DMA, and megacore-safe).
    e_ids = lax.broadcasted_iota(jnp.int32, (b_pad, te), 1) + k * te
    cnt = jnp.zeros((b_pad, te), jnp.int32)
    # TODO(synk): for large L switch to lax.fori_loop(..., unroll=8) over columns.
    for l in range(bag_len):
        cnt = cnt + (idx[:, l : l + 1] == e_ids).astype(jnp.int32)
    counts = cnt.astype(jnp.float32)

    # MXU: partial sum over this E-slice, accumulated into the resident output.
    out_ref[...] += jnp.dot(counts, w_ref[...], preferred_element_type=jnp.float32)


@jax.jit
def embedding_bag_collection(indices, weights):
    """indices: (B, L) int32; weights: (num_bags, E, D) float32.
    Returns (num_bags * B, D) float32, matching torch.cat([bag(inputs), ...])."""
    num_bags, E, D = weights.shape
    B, L = indices.shape

    B_pad = _round_up(B, 8)

    # D (lane / output) tiling: full-dim block if small, else 128-aligned tiles.
    if D >= 128:
        D_pad = _round_up(D, 128)
        TD = _pick_tile(D_pad, 128, 512)
    else:
        D_pad, TD = D, D

    # E (contraction) tiling: full-dim block for small tables, else 128-aligned
    # reduction tiles so the weight slab + output stay bounded in VMEM.
    if E > 1024:
        E_pad = _round_up(E, 128)
        TE = _pick_tile(E_pad, 128, 512)
    else:
        E_pad = _round_up(E, 8)
        TE = E_pad

    # Indices: pad batch rows with -1 so they match no embedding row (exact zeros).
    idx_p = jnp.full((B_pad, L), -1, jnp.int32).at[:B, :].set(indices.astype(jnp.int32))

    # Weights stay in native (num_bags, E, D) layout; pad only if tiling needs it.
    w = weights.astype(jnp.float32)
    if (E_pad, D_pad) != (E, D):
        # TODO(synk): for production tables, keep the table stored pre-padded
        # outside the per-step jit to avoid this whole-table HBM round trip.
        w = jnp.zeros((num_bags, E_pad, D_pad), jnp.float32).at[:, :E, :D].set(w)

    grid = (num_bags, D_pad // TD, E_pad // TE)

    out = pl.pallas_call(
        _ebc_kernel,
        out_shape=jax.ShapeDtypeStruct((num_bags, B_pad, D_pad), jnp.float32),
        grid_spec=pltpu.PrefetchScalarGridSpec(
            num_scalar_prefetch=0,
            grid=grid,
            in_specs=[
                # Shared indices: one resident block.
                pl.BlockSpec((B_pad, L), lambda b, j, k: (0, 0)),
                # Stream weight slabs straight from the native (bag, E, D) layout.
                pl.BlockSpec((pl.Squeezed(), TE, TD), lambda b, j, k: (b, k, j)),
            ],
            # Output tile ignores k -> resident accumulator across the E axis.
            out_specs=pl.BlockSpec((pl.Squeezed(), B_pad, TD), lambda b, j, k: (b, 0, j)),
        ),
        compiler_params=pltpu.CompilerParams(
            dimension_semantics=("parallel", "parallel", "arbitrary"),
            vmem_limit_bytes=32 * 1024 * 1024,
        ),
    )(idx_p, w)

    # (num_bags, B_pad, D_pad) -> (num_bags*B, D); the slice removes padded
    # batch rows / feature cols (load-bearing even though they are zeros).
    return out[:, :B, :D].reshape(num_bags * B, D)


def reference(indices, weights):
    # Pure-JAX reference: gather then sum over L, concat over bags along dim 0.
    outs = [jnp.sum(w[indices], axis=1) for w in weights]
    return jnp.concatenate(outs, axis=0)


if __name__ == "__main__":
    num_bags = 4
    num_embeddings_per_bag = 16
    num_dims = 32
    B, L = 8, 8

    key = jax.random.PRNGKey(0)
    k_w, k_idx = jax.random.split(key)

    # nn.EmbeddingBag default init: weight ~ N(0, 1)
    weights = jax.random.normal(
        k_w, (num_bags, num_embeddings_per_bag, num_dims), dtype=jnp.float32
    )
    indices = jax.random.randint(
        k_idx, (B, L), minval=0, maxval=num_embeddings_per_bag, dtype=jnp.int32
    )

    out = embedding_bag_collection(indices, weights)
    out = jax.block_until_ready(out)

    ref = reference(indices, weights)
    assert out.shape == (num_bags * B, num_dims), out.shape
    assert jnp.allclose(out, ref, atol=1e-5, rtol=1e-5), "mismatch vs reference"

    print("KERNEL_OK")
</pallas_src>

<mosaic_0001>
module attributes {stable_mosaic.version = 11 : i64} {
  func.func @_ebc_kernel(%arg0: i32, %arg1: i32, %arg2: i32, %arg3: memref<8x8xi32, #tpu.memory_space<vmem>>, %arg4: memref<1x16x32xf32, #tpu.memory_space<vmem>>, %arg5: memref<1x8x32xf32, #tpu.memory_space<vmem>>) attributes {dimension_semantics = [#tpu.dimension_semantics<parallel>, #tpu.dimension_semantics<parallel>, #tpu.dimension_semantics<arbitrary>], iteration_bounds = array<i64: 4, 1, 1>, scalar_prefetch = 0 : i64, scratch_operands = 0 : i64, tpu.core_type = #tpu.core_type<tc>, window_params = [{pipeline_mode = #tpu.pipeline_mode<synchronous>, transform_indices = @transform_0, window_bounds = array<i64: 8, 8>}, {transform_indices = @transform_1, window_bounds = array<i64: 1, 16, 32>}, {transform_indices = @transform_2, window_bounds = array<i64: 1, 8, 32>}]} {
    %c0_i32 = arith.constant 0 : i32
    %0 = arith.cmpi eq, %arg2, %c0_i32 : i32
    %1 = arith.extui %0 : i1 to i32
    %c0_i32_0 = arith.constant 0 : i32
    %2 = arith.cmpi ne, %1, %c0_i32_0 : i32
    scf.if %2 {
      %cst_12 = arith.constant 0.000000e+00 : f32
      %59 = vector.broadcast %cst_12 : f32 to vector<8x32xf32>
      %c0_13 = arith.constant 0 : index
      %c0_14 = arith.constant 0 : index
      %c0_15 = arith.constant 0 : index
      %60 = vector.load %arg5[%c0_13, %c0_14, %c0_15] : memref<1x8x32xf32, #tpu.memory_space<vmem>>, vector<1x8x32xf32>
      %61 = vector.shape_cast %60 : vector<1x8x32xf32> to vector<8x32xf32>
      %62 = vector.shape_cast %59 : vector<8x32xf32> to vector<1x8x32xf32>
      tpu.vector_store %arg5[%c0_13, %c0_14, %c0_15], %62 {strides = array<i32>} : memref<1x8x32xf32, #tpu.memory_space<vmem>>, vector<1x8x32xf32>,
    } else {
    }
    %c0 = arith.constant 0 : index
    %c0_1 = arith.constant 0 : index
    %3 = vector.load %arg3[%c0, %c0_1] : memref<8x8xi32, #tpu.memory_space<vmem>>, vector<8x8xi32>
    %4 = tpu.iota {dimensions = array<i32: 1>} : vector<8x16xi32>
    %c16_i32 = arith.constant 16 : i32
    %5 = arith.muli %arg2, %c16_i32 : i32
    %6 = vector.broadcast %5 : i32 to vector<8x16xi32>
    %7 = arith.addi %4, %6 : vector<8x16xi32>
    %c0_i32_2 = arith.constant 0 : i32
    %8 = vector.broadcast %c0_i32_2 : i32 to vector<8x16xi32>
    %9 = vector.extract_strided_slice %3 {offsets = [0, 0], sizes = [8, 1], strides = [1, 1]} : vector<8x8xi32> to vector<8x1xi32>
    %10 = vector.broadcast %9 : vector<8x1xi32> to vector<8x16xi32>
    %11 = arith.cmpi eq, %10, %7 : vector<8x16xi32>
    %12 = arith.extui %11 : vector<8x16xi1> to vector<8x16xi32>
    %13 = arith.addi %8, %12 : vector<8x16xi32>
    %14 = vector.extract_strided_slice %3 {offsets = [0, 1], sizes = [8, 1], strides = [1, 1]} : vector<8x8xi32> to vector<8x1xi32>
    %15 = vector.broadcast %14 : vector<8x1xi32> to vector<8x16xi32>
    %16 = arith.cmpi eq, %15, %7 : vector<8x16xi32>
    %17 = arith.extui %16 : vector<8x16xi1> to vector<8x16xi32>
    %18 = arith.addi %13, %17 : vector<8x16xi32>
    %19 = vector.extract_strided_slice %3 {offsets = [0, 2], sizes = [8, 1], strides = [1, 1]} : vector<8x8xi32> to vector<8x1xi32>
    %20 = vector.broadcast %19 : vector<8x1xi32> to vector<8x16xi32>
    %21 = arith.cmpi eq, %20, %7 : vector<8x16xi32>
    %22 = arith.extui %21 : vector<8x16xi1> to vector<8x16xi32>
    %23 = arith.addi %18, %22 : vector<8x16xi32>
    %24 = vector.extract_strided_slice %3 {offsets = [0, 3], sizes = [8, 1], strides = [1, 1]} : vector<8x8xi32> to vector<8x1xi32>
    %25 = vector.broadcast %24 : vector<8x1xi32> to vector<8x16xi32>
    %26 = arith.cmpi eq, %25, %7 : vector<8x16xi32>
    %27 = arith.extui %26 : vector<8x16xi1> to vector<8x16xi32>
    %28 = arith.addi %23, %27 : vector<8x16xi32>
    %29 = vector.extract_strided_slice %3 {offsets = [0, 4], sizes = [8, 1], strides = [1, 1]} : vector<8x8xi32> to vector<8x1xi32>
    %30 = vector.broadcast %29 : vector<8x1xi32> to vector<8x16xi32>
    %31 = arith.cmpi eq, %30, %7 : vector<8x16xi32>
    %32 = arith.extui %31 : vector<8x16xi1> to vector<8x16xi32>
    %33 = arith.addi %28, %32 : vector<8x16xi32>
    %34 = vector.extract_strided_slice %3 {offsets = [0, 5], sizes = [8, 1], strides = [1, 1]} : vector<8x8xi32> to vector<8x1xi32>
    %35 = vector.broadcast %34 : vector<8x1xi32> to vector<8x16xi32>
    %36 = arith.cmpi eq, %35, %7 : vector<8x16xi32>
    %37 = arith.extui %36 : vector<8x16xi1> to vector<8x16xi32>
    %38 = arith.addi %33, %37 : vector<8x16xi32>
    %39 = vector.extract_strided_slice %3 {offsets = [0, 6], sizes = [8, 1], strides = [1, 1]} : vector<8x8xi32> to vector<8x1xi32>
    %40 = vector.broadcast %39 : vector<8x1xi32> to vector<8x16xi32>
    %41 = arith.cmpi eq, %40, %7 : vector<8x16xi32>
    %42 = arith.extui %41 : vector<8x16xi1> to vector<8x16xi32>
    %43 = arith.addi %38, %42 : vector<8x16xi32>
    %44 = vector.extract_strided_slice %3 {offsets = [0, 7], sizes = [8, 1], strides = [1, 1]} : vector<8x8xi32> to vector<8x1xi32>
    %45 = vector.broadcast %44 : vector<8x1xi32> to vector<8x16xi32>
    %46 = arith.cmpi eq, %45, %7 : vector<8x16xi32>
    %47 = arith.extui %46 : vector<8x16xi1> to vector<8x16xi32>
    %48 = arith.addi %43, %47 : vector<8x16xi32>
    %49 = arith.sitofp %48 : vector<8x16xi32> to vector<8x16xf32>
    %c0_3 = arith.constant 0 : index
    %c0_4 = arith.constant 0 : index
    %c0_5 = arith.constant 0 : index
    %50 = vector.load %arg5[%c0_3, %c0_4, %c0_5] : memref<1x8x32xf32, #tpu.memory_space<vmem>>, vector<1x8x32xf32>
    %51 = vector.shape_cast %50 : vector<1x8x32xf32> to vector<8x32xf32>
    %c0_6 = arith.constant 0 : index
    %c0_7 = arith.constant 0 : index
    %c0_8 = arith.constant 0 : index
    %52 = vector.load %arg4[%c0_6, %c0_7, %c0_8] : memref<1x16x32xf32, #tpu.memory_space<vmem>>, vector<1x16x32xf32>
    %53 = vector.shape_cast %52 : vector<1x16x32xf32> to vector<16x32xf32>
    %cst = arith.constant dense<0.000000e+00> : vector<8x32xf32>
    %54 = tpu.matmul %49, %53, %cst {dimension_numbers = #tpu.dot_dimension_numbers<[1], [0], [0], [1], [0, 0, 1, 1], [], []>} : vector<8x16xf32>, vector<16x32xf32>, vector<8x32xf32> -> vector<8x32xf32>
    %55 = arith.addf %51, %54 : vector<8x32xf32>
    %c0_9 = arith.constant 0 : index
    %c0_10 = arith.constant 0 : index
    %c0_11 = arith.constant 0 : index
    %56 = vector.load %arg5[%c0_9, %c0_10, %c0_11] : memref<1x8x32xf32, #tpu.memory_space<vmem>>, vector<1x8x32xf32>
    %57 = vector.shape_cast %56 : vector<1x8x32xf32> to vector<8x32xf32>
    %58 = vector.shape_cast %55 : vector<8x32xf32> to vector<1x8x32xf32>
    tpu.vector_store %arg5[%c0_9, %c0_10, %c0_11], %58 {strides = array<i32>} : memref<1x8x32xf32, #tpu.memory_space<vmem>>, vector<1x8x32xf32>,
    return
  }
  func.func @transform_0(%arg0: i32, %arg1: i32, %arg2: i32) -> (i32, i32) {
    %c0_i32 = arith.constant 0 : i32
    %c0_i32_0 = arith.constant 0 : i32
    %c0_i32_1 = arith.constant 0 : i32
    return %c0_i32, %c0_i32_0 : i32, i32
  }
  func.func @transform_1(%arg0: i32, %arg1: i32, %arg2: i32) -> (i32, i32, i32) {
    %c0_i32 = arith.constant 0 : i32
    return %arg0, %arg2, %arg1 : i32, i32, i32
  }
  func.func @transform_2(%arg0: i32, %arg1: i32, %arg2: i32) -> (i32, i32, i32) {
    %c0_i32 = arith.constant 0 : i32
    %c0_i32_0 = arith.constant 0 : i32
    return %arg0, %c0_i32, %arg1 : i32, i32, i32
  }
}

</mosaic_0001>

<llo_original>
// kernel: embedding_bag_collection.1
$region0: #{embedding_bag_collection.1}
  #allocation0 [shape = 'u32[]', space=smem, size = 0x4, offset = 0x4, fixed_abs, tag = 'smem constant byte address 0x4 - core index']
  #allocation1 [shape = 'u32[144,128]{1,0:T(1,128)}', space=vmem, size = 0x12000, scoped, tag = 'internal scratch']
  %s0 = inlined_call_operand.hbm [shape: s32[8,8], index: 0, kind: input, shape index: {}]
  %s1 = inlined_call_operand.hbm [shape: f32[4,16,32], index: 1, kind: input, shape index: {}]
  %s2 = inlined_call_operand.hbm [shape: f32[4,8,32], index: 2, kind: output, shape index: {}]
  %s3 = sld [smem:[#allocation0]]
  $region53: #{embedding_bag_collection.1} parent=0
    _
  %s5 = ssub.s32 1, %s3
  %s6 = scalar_select 0, %s5, %s3
  $region1: #{embedding_bag_collection.1} parent=0
    #allocation2 [shape = 'u8[4096]{0}', space=vmem, size = 0x1000, scoped, tag = 'input window, operand 0, single buffered']
    #allocation3 [shape = 's32[2]{0}', space=sflag, size = 0x8, scoped, tag = 'scoped memory for embedding_bag_collection.1']
    #allocation4 [shape = 's32[2]{0}', space=sflag, size = 0x8, scoped, tag = 'scoped memory for embedding_bag_collection.1']
    #allocation5 [shape = 'u8[16384]{0}', space=vmem, size = 0x4000, scoped, tag = 'input window, operand 1']
    #allocation6 [shape = 's32[2]{0}', space=sflag, size = 0x8, scoped, tag = 'scoped memory for embedding_bag_collection.1']
    #allocation7 [shape = 'u8[8192]{0}', space=vmem, size = 0x2000, scoped, tag = 'output window, operand 0']
    %7 = vsyncpa [#allocation3], 0
    %8 = vsyncpa [#allocation6], 0
    %s9 = scalar_lea.sflag [#allocation6], 1
    %10 = vsyncpa %s9, 0
    %11 = vsyncpa [#allocation4], 0
    %s12 = scalar_lea.sflag [#allocation4], 1
    %13 = vsyncpa %s12, 0
    loop: start=0, step=1, limit=6
    $region2: #{embedding_bag_collection.1} parent=1 // loop_pre_header
      _
    $region3: #{embedding_bag_collection.1} parent=1 // loop_header
      %s15 = sphi 0, %s19
      %p16 = scmp.ge.s32.totalorder %s15, 6
      %s22 = sphi 0, %s41
      %s23 = sphi 0, %s37
      %s24 = sphi 0, %s33
      %s25 = sphi 0, %s22
      %s26 = sphi 0, %s23
      %s27 = sphi 0, %s24
      %s28 = sphi 0, %s25
      %s29 = sphi 0, %s26
      %s30 = sphi 0, %s27
      %s42 = sphi 0, %s42
      %s44 = sphi 0, %s42
      %s45 = sphi 0, %s44
      %s59 = sphi 0, %s45
      %s69 = sphi 0, %s71
      %s72 = sphi 0, %s69
      %s73 = sphi 0, %s72
      %s89 = sphi 0, %s73
      %s97 = sphi 0, %s99
      %s100 = sphi 0, %s97
      %s101 = sphi 0, %s100
      %s117 = sphi 0, %s101
    $region4: #{embedding_bag_collection.1} parent=1 // loop_header_branch
      %18 = sbr.rel (%p16) target = $region8
    $region5: #{embedding_bag_collection.1} parent=1 // loop_body
      %s20 = ssub.s32 %s15, 1
      %s21 = ssub.s32 %s15, 2
      %s31 = sadd.s32 1, %s24
      %p32 = scmp.ge.s32.totalorder %s31, 1
      %s33 = scalar_select %p32, 0, %s31
      %s34 = sadd.s32 1, %s23
      %s35 = scalar_select %p32, %s34, %s23
      %p36 = scmp.ge.s32.totalorder %s35, 1
      %s37 = scalar_select %p36, 0, %s35
      %s38 = sadd.s32 1, %s22
      %s39 = scalar_select %p36, %s38, %s22
      %p40 = scmp.ge.s32.totalorder %s39, 4
      %s41 = scalar_select %p40, 0, %s39
      %s43 = sadd.s32 %s42, 1
      %p46 = scmp.eq.s32.totalorder %s15, 3
      %p47 = scmp.ne.s32.totalorder %s42, %s44
      %p48 = scmp.eq.s32.totalorder %s15, 0
      %p49 = por %p47, %p48
      %p50 = scmp.ne.s32.totalorder %s42, %s44
      %p51 = scmp.eq.s32.totalorder %s20, 3
      %p52 = por %p50, %p51
      %p53 = scmp.ne.s32.totalorder %s44, %s45
      %p54 = scmp.eq.s32.totalorder %s20, 0
      %p55 = por %p53, %p54
      %p56 = scmp.ne.s32.totalorder %s44, %s45
      %p57 = scmp.eq.s32.totalorder %s21, 3
      %p58 = por %p56, %p57
      %p60 = scmp.ne.s32.totalorder %s45, %s59
      %p61 = scmp.eq.s32.totalorder %s21, 0
      %p62 = por %p60, %p61
      %s63 = ssub.s32 %s22, %s41
      %s64 = ssub.s32 %s24, %s33
      %s65 = sor.u32 %s63, %s64
      %s66 = ssub.s32 %s23, %s37
      %s67 = sor.u32 %s65, %s66
      %p68 = scmp.eq.s32.totalorder %s67, 0
      %s70 = sadd.s32 %s69, 1
      %s71 = scalar_select %p68, %s69, %s70
      %p74 = pneg %p68
      %p75 = scmp.eq.s32.totalorder %s15, 3
      %p76 = por %p74, %p75
      %p77 = scmp.ne.s32.totalorder %s69, %s72
      %p78 = scmp.eq.s32.totalorder %s15, 0
      %p79 = por %p77, %p78
      %p80 = scmp.ne.s32.totalorder %s69, %s72
      %p81 = scmp.eq.s32.totalorder %s20, 3
      %p82 = por %p80, %p81
      %p83 = scmp.ne.s32.totalorder %s72, %s73
      %p84 = scmp.eq.s32.totalorder %s20, 0
      %p85 = por %p83, %p84
      %p86 = scmp.ne.s32.totalorder %s72, %s73
      %p87 = scmp.eq.s32.totalorder %s21, 3
      %p88 = por %p86, %p87
      %p90 = scmp.ne.s32.totalorder %s73, %s89
      %p91 = scmp.eq.s32.totalorder %s21, 0
      %p92 = por %p90, %p91
      %s93 = ssub.s32 %s22, %s41
      %s94 = ssub.s32 %s23, %s37
      %s95 = sor.u32 %s93, %s94
      %p96 = scmp.eq.s32.totalorder %s95, 0
      %s98 = sadd.s32 %s97, 1
      %s99 = scalar_select %p96, %s97, %s98
      %p102 = pneg %p96
      %p103 = scmp.eq.s32.totalorder %s15, 3
      %p104 = por %p102, %p103
      %p105 = scmp.ne.s32.totalorder %s97, %s100
      %p106 = scmp.eq.s32.totalorder %s15, 0
      %p107 = por %p105, %p106
      %p108 = scmp.ne.s32.totalorder %s97, %s100
      %p109 = scmp.eq.s32.totalorder %s20, 3
      %p110 = por %p108, %p109
      %p111 = scmp.ne.s32.totalorder %s100, %s101
      %p112 = scmp.eq.s32.totalorder %s20, 0
      %p113 = por %p111, %p112
      %p114 = scmp.ne.s32.totalorder %s100, %s101
      %p115 = scmp.eq.s32.totalorder %s21, 3
      %p116 = por %p114, %p115
      %p118 = scmp.ne.s32.totalorder %s101, %s117
      %p119 = scmp.eq.s32.totalorder %s21, 0
      %p120 = por %p118, %p119
      %p121 = scmp.le.s32.totalorder 1, %s15
      %p122 = scmp.lt.s32.totalorder %s15, 5
      %p123 = pnand %p121, %p122
      %p124 = pneg %p123
      // Predicated region
      $region9: #{embedding_bag_collection.1} parent=5 // pred_check
        _
      $region10: #{embedding_bag_collection.1} parent=5 // pred_check_branch
        %126 = sbr.rel (%p123) target = $region12
      $region11: #{embedding_bag_collection.1} parent=5 // pred_region
        %s127 = ssub.s32 %s15, 1
        // Predicated region
        $region13: #{embedding_bag_collection.1} parent=11 // pred_check
          %p128 = pneg %p55
        $region14: #{embedding_bag_collection.1} parent=11 // pred_check_branch
          %130 = sbr.rel (%p128) target = $region16
        $region15: #{embedding_bag_collection.1} parent=11 // pred_region
          %s132 = ssub.s32 128, 128
          %133 = vsyncadd [#allocation3], %s132
          %s135 = sshll.u32 [#allocation2], 4
          %s136 = int_to_ptr.vmem [resolvable:$true] %s135
          %138 = dma.hbm_to_vmem [thread:$0]  %s0, 128, %s136, [#allocation3]
        $region16: #{embedding_bag_collection.1} parent=11 // pred_fallthru
          _
      $region12: #{embedding_bag_collection.1} parent=5 // pred_fallthru
        _
      %p139 = scmp.lt.s32.totalorder %s15, 4
      // Predicated region
      $region17: #{embedding_bag_collection.1} parent=5 // pred_check
        %p140 = pneg %p139
      $region18: #{embedding_bag_collection.1} parent=5 // pred_check_branch
        %142 = sbr.rel (%p140) target = $region20
      $region19: #{embedding_bag_collection.1} parent=5 // pred_region
        // Predicated region
        $region21: #{embedding_bag_collection.1} parent=19 // pred_check
          %p143 = pneg %p79
        $region22: #{embedding_bag_collection.1} parent=19 // pred_check_branch
          %145 = sbr.rel (%p143) target = $region24
        $region23: #{embedding_bag_collection.1} parent=19 // pred_region
          %s146 = sand.u32 %s69, 1
          %s147 = scalar_lea.sflag [#allocation6], %s146
          %s148 = sand.u32 %s69, 1
          %s149 = smul.addr %s148, 16
          %s150 = scalar_lea.vmem [#allocation5], %s149
          %s151 = smul.u32 2, %s24
          %s153 = ssub.s32 256, 256
          %154 = vsyncadd %s147, %s153
          %s155 = sadd.s32 %s23, %s151
          %s156 = smul.addr %s22, 2
          %s157 = sadd.s32 %s155, %s156
          %s158 = smul.addr %s157, 128
          %s159 = scalar_lea.hbm %s1, %s158
          %s160 = sshll.u32 %s150, 4
          %s161 = int_to_ptr.vmem [resolvable:$true] %s160
          %166 = dma.hbm_to_vmem [thread:$0]  %s159, 256, %s161, %s147, 128, 128, 8
        $region24: #{embedding_bag_collection.1} parent=19 // pred_fallthru
          _
      $region20: #{embedding_bag_collection.1} parent=5 // pred_fallthru
        _
      %p167 = scmp.le.s32.totalorder 1, %s15
      %p168 = scmp.lt.s32.totalorder %s15, 5
      %p169 = pnand %p167, %p168
      %p170 = pneg %p169
      // Predicated region
      $region25: #{embedding_bag_collection.1} parent=5 // pred_check
        _
      $region26: #{embedding_bag_collection.1} parent=5 // pred_check_branch
        %172 = sbr.rel (%p169) target = $region28
      $region27: #{embedding_bag_collection.1} parent=5 // pred_region
        %s173 = ssub.s32 %s15, 1
        // Predicated region
        $region29: #{embedding_bag_collection.1} parent=27 // pred_check
          %p174 = pneg %p55
        $region30: #{embedding_bag_collection.1} parent=27 // pred_check_branch
          %176 = sbr.rel (%p174) target = $region32
        $region31: #{embedding_bag_collection.1} parent=27 // pred_region
          %177 = dma.done [#allocation3], 128
        $region32: #{embedding_bag_collection.1} parent=27 // pred_fallthru
          _
        %s178 = sand.u32 %s72, 1
        %s179 = scalar_lea.sflag [#allocation6], %s178
        %s180 = sand.u32 %s72, 1
        %s181 = smul.addr %s180, 16
        %s182 = scalar_lea.vmem [#allocation5], %s181
        // Predicated region
        $region33: #{embedding_bag_collection.1} parent=27 // pred_check
          %p183 = pneg %p85
        $region34: #{embedding_bag_collection.1} parent=27 // pred_check_branch
          %185 = sbr.rel (%p183) target = $region36
        $region35: #{embedding_bag_collection.1} parent=27 // pred_region
          %186 = dma.done %s179, 256
        $region36: #{embedding_bag_collection.1} parent=27 // pred_fallthru
          _
        %p187 = pneg %p55
        %p188 = pneg %p52
        %s189 = sand.u32 %s72, 1
        %s190 = scalar_lea.sflag [#allocation6], %s189
        %s191 = sand.u32 %s72, 1
        %s192 = smul.addr %s191, 16
        %s193 = scalar_lea.vmem [#allocation5], %s192
        %p194 = pneg %p85
        %p195 = pneg %p82
        %p196 = pneg %p113
        %p197 = pneg %p110
        %s198 = sand.u32 %s100, 1
        %s199 = scalar_lea.sflag [#allocation4], %s198
        %s200 = sand.u32 %s100, 1
        %s201 = smul.addr %s200, 8
        %s202 = scalar_lea.vmem [#allocation7], %s201
        %s203 = smul.u32 2, %s27
        %p204 = scmp.eq.s32.totalorder %s27, 0
        // Predicated region
        $region37: #{embedding_bag_collection.1} parent=27 // pred_check
          %p205 = pneg %p204
        $region38: #{embedding_bag_collection.1} parent=27 // pred_check_branch
          %207 = sbr.rel (%p205) target = $region40
        $region39: #{embedding_bag_collection.1} parent=27 // pred_region
          %vm208 = vcmask 261120
          %209 = vst.msk [vmem:[%s202] sm:$0xff] %vm208, 0.0
        $region40: #{embedding_bag_collection.1} parent=27 // pred_fallthru
          _
        %v210 = vld [vmem:[#allocation2] sm:$0xff]
        %v211 = vlaneseq
        %v212 = vand.u32 %v211, 127
        %s213 = smul.u32 %s27, 16
        %v214 = vstv %s213
        %v215 = vadd.s32 %v212, %v214
        %216 = vset.pattern.permute.xlu0 0
        %217 = vperm.xlu0 %216, %v210
        %v218 = vpop.permute.xlu0 %217
        %vm219 = vcmp.eq.s32.totalorder %v218, %v215
        %v220 = vsel %vm219, 1, 0
        %221 = vset.pattern.permute.xlu0 1
        %222 = vperm.xlu0 %221, %v210
        %v223 = vpop.permute.xlu0 %222
        %vm224 = vcmp.eq.s32.totalorder %v223, %v215
        %v225 = vsel %vm224, 1, 0
        %v226 = vadd.s32 %v220, %v225
        %227 = vset.pattern.permute.xlu0 2
        %228 = vperm.xlu0 %227, %v210
        %v229 = vpop.permute.xlu0 %228
        %vm230 = vcmp.eq.s32.totalorder %v229, %v215
        %v231 = vsel %vm230, 1, 0
        %v232 = vadd.s32 %v226, %v231
        %233 = vset.pattern.permute.xlu0 3
        %234 = vperm.xlu0 %233, %v210
        %v235 = vpop.permute.xlu0 %234
        %vm236 = vcmp.eq.s32.totalorder %v235, %v215
        %v237 = vsel %vm236, 1, 0
        %v238 = vadd.s32 %v232, %v237
        %239 = vset.pattern.permute.xlu0 4
        %240 = vperm.xlu0 %239, %v210
        %v241 = vpop.permute.xlu0 %240
        %vm242 = vcmp.eq.s32.totalorder %v241, %v215
        %v243 = vsel %vm242, 1, 0
        %v244 = vadd.s32 %v238, %v243
        %245 = vset.pattern.permute.xlu0 5
        %246 = vperm.xlu0 %245, %v210
        %v247 = vpop.permute.xlu0 %246
        %vm248 = vcmp.eq.s32.totalorder %v247, %v215
        %v249 = vsel %vm248, 1, 0
        %v250 = vadd.s32 %v244, %v249
        %251 = vset.pattern.permute.xlu0 6
        %252 = vperm.xlu0 %251, %v210
        %v253 = vpop.permute.xlu0 %252
        %vm254 = vcmp.eq.s32.totalorder %v253, %v215
        %v255 = vsel %vm254, 1, 0
        %v256 = vadd.s32 %v250, %v255
        %257 = vset.pattern.permute.xlu0 7
        %258 = vperm.xlu0 %257, %v210
        %v259 = vpop.permute.xlu0 %258
        %vm260 = vcmp.eq.s32.totalorder %v259, %v215
        %v261 = vsel %vm260, 1, 0
        %v262 = vadd.s32 %v256, %v261
        %v263 = vcvt.s32.f32 %v262
        %v264 = vld [vmem:[%s202] sm:$0xff]
        %v265 = vld [vmem:[%s182] sm:$0xff]
        %v266 = vld [vmem:[%s182 + $0x8] sm:$0xff]
        %vm267 = vcmask 130048
        %v269 = vsel %vm267, %v263, 0
        %271 = vmatprep.subr.mxu0 0.0
        %272 = vmatpush1.msra.mxu0 %v265
        %273 = vmatprep.subr.mxu0 0.0
        %274 = vmatpush1.msra.mxu0 %v266
        %275 = vmatprep.subr.mxu0 0.0
        %276 = vmatpush1.msra.mxu0 0.0
        %277 = vmatprep.subr.mxu0 0.0
        %278 = vmatpush1.msra.mxu0 0.0
        %279 = vmatprep.subr.mxu0 0.0
        %280 = vmatpush1.msra.mxu0 0.0
        %281 = vmatprep.subr.mxu0 0.0
        %282 = vmatpush1.msra.mxu0 0.0
        %283 = vmatprep.subr.mxu0 0.0
        %284 = vmatpush1.msra.mxu0 0.0
        %285 = vmatprep.subr.mxu0 0.0
        %286 = vmatpush1.msra.mxu0 0.0
        %287 = vmatprep.subr.mxu0 0.0
        %288 = vmatpush1.msra.mxu0 0.0
        %289 = vmatprep.subr.mxu0 0.0
        %290 = vmatpush1.msra.mxu0 0.0
        %291 = vmatprep.subr.mxu0 0.0
        %292 = vmatpush1.msra.mxu0 0.0
        %293 = vmatprep.subr.mxu0 0.0
        %294 = vmatpush1.msra.mxu0 0.0
        %295 = vmatprep.subr.mxu0 0.0
        %296 = vmatpush1.msra.mxu0 0.0
        %297 = vmatprep.subr.mxu0 0.0
        %298 = vmatpush1.msra.mxu0 0.0
        %299 = vmatprep.subr.mxu0 0.0
        %300 = vmatpush1.msra.mxu0 0.0
        %301 = vmatprep.subr.mxu0 0.0
        %302 = vmatpush1.msra.mxu0 0.0
        %303 = vmatprep.subr.mxu0 0.0
        %304 = vmatpush1.msra.mxu0 0.0
        %305 = vmatprep.subr.mxu0 0.0
        %306 = vmatpush1.msra.mxu0 0.0
        %307 = vmatprep.subr.mxu0 0.0
        %308 = vmatpush1.msra.mxu0 0.0
        %309 = vmatprep.subr.mxu0 0.0
        %310 = vmatpush1.msra.mxu0 0.0
        %311 = vmatprep.subr.mxu0 0.0
        %312 = vmatpush1.msra.mxu0 0.0
        %313 = vmatprep.subr.mxu0 0.0
        %314 = vmatpush1.msra.mxu0 0.0
        %315 = vmatprep.subr.mxu0 0.0
        %316 = vmatpush1.msra.mxu0 0.0
        %317 = vmatprep.subr.mxu0 0.0
        %318 = vmatpush1.msra.mxu0 0.0
        %319 = vmatprep.subr.mxu0 0.0
        %320 = vmatpush1.msra.mxu0 0.0
        %321 = vmatprep.subr.mxu0 0.0
        %322 = vmatpush1.msra.mxu0 0.0
        %323 = vmatprep.subr.mxu0 0.0
        %324 = vmatpush1.msra.mxu0 0.0
        %325 = vmatprep.subr.mxu0 0.0
        %326 = vmatpush1.msra.mxu0 0.0
        %327 = vmatprep.subr.mxu0 0.0
        %328 = vmatpush1.msra.mxu0 0.0
        %329 = vmatprep.subr.mxu0 0.0
        %330 = vmatpush1.msra.mxu0 0.0
        %331 = vmatprep.subr.mxu0 0.0
        %332 = vmatpush1.msra.mxu0 0.0
        %333 = vmatprep.subr.mxu0 0.0
        %334 = vmatpush1.msra.mxu0 0.0
        %335 = vmatprep.mubr.f32.mxu0 0.0
        %336 = vmatmul.mubr.f32.gmra.mrb[0].mxu0 %v269
        %v337 = vpop.f32.mrb[0].mxu0
        %v338 = vadd.f32 0.0, %v337
        %v339 = vpop.f32.mrb[0].mxu0
        %340 = vdwg.mxu0
        %v341 = vadd.f32 %v264, %v338
        %vm342 = vcmask 261120
        %343 = vst.msk [vmem:[%s202] sm:$0xff] %vm342, %v341
        %s344 = sand.u32 %s100, 1
        %s345 = scalar_lea.sflag [#allocation4], %s344
        %s346 = sand.u32 %s100, 1
        %s347 = smul.addr %s346, 8
        %s348 = scalar_lea.vmem [#allocation7], %s347
        // Predicated region
        $region41: #{embedding_bag_collection.1} parent=27 // pred_check
          %p349 = pneg %p110
        $region42: #{embedding_bag_collection.1} parent=27 // pred_check_branch
          %351 = sbr.rel (%p349) target = $region44
        $region43: #{embedding_bag_collection.1} parent=27 // pred_region
          %s353 = ssub.s32 128, 128
          %354 = vsyncadd %s345, %s353
          %s355 = sadd.s32 %s26, %s25
          %s356 = smul.addr %s355, 128
          %s357 = scalar_lea.hbm %s2, %s356
          %s359 = sshll.u32 %s348, 4
          %s360 = int_to_ptr.vmem [resolvable:$true] %s359
          %362 = dma.vmem_to_hbm [thread:$0]  %s360, 128, %s357, %s345
        $region44: #{embedding_bag_collection.1} parent=27 // pred_fallthru
          _
      $region28: #{embedding_bag_collection.1} parent=5 // pred_fallthru
        _
      %p363 = scmp.le.s32.totalorder 2, %s15
      // Predicated region
      $region45: #{embedding_bag_collection.1} parent=5 // pred_check
        %p364 = pneg %p363
      $region46: #{embedding_bag_collection.1} parent=5 // pred_check_branch
        %366 = sbr.rel (%p364) target = $region48
      $region47: #{embedding_bag_collection.1} parent=5 // pred_region
        %s367 = ssub.s32 %s15, 2
        // Predicated region
        $region49: #{embedding_bag_collection.1} parent=47 // pred_check
          %p368 = pneg %p116
        $region50: #{embedding_bag_collection.1} parent=47 // pred_check_branch
          %370 = sbr.rel (%p368) target = $region52
        $region51: #{embedding_bag_collection.1} parent=47 // pred_region
          %s371 = sand.u32 %s101, 1
          %s372 = scalar_lea.sflag [#allocation4], %s371
          %s373 = sand.u32 %s101, 1
          %s374 = smul.addr %s373, 8
          %s375 = scalar_lea.vmem [#allocation7], %s374
          %376 = dma.done %s372, 128
        $region52: #{embedding_bag_collection.1} parent=47 // pred_fallthru
          _
      $region48: #{embedding_bag_collection.1} parent=5 // pred_fallthru
        _
    $region6: #{embedding_bag_collection.1} parent=1 // loop_footer
      %s19 = sadd.s32 1, %s15
    $region7: #{embedding_bag_collection.1} parent=1 // loop_footer_branch
      %14 = sbr.rel target = $region3
    $region8: #{embedding_bag_collection.1} parent=1 // loop_exit
      _
    %377 = vsyncpa [#allocation3], 1
    %s378 = scalar_lea.sflag [#allocation3], 1
    %379 = vsyncpa %s378, 1
    %380 = vsyncpa [#allocation6], 1
    %s381 = scalar_lea.sflag [#allocation6], 1
    %382 = vsyncpa %s381, 1
    %383 = vsyncpa [#allocation4], 1
    %s384 = scalar_lea.sflag [#allocation4], 1
    %385 = vsyncpa %s384, 1

</llo_original>
